<compile_context>
chip_gen: v5e
topology: v5e:2x2
jax: 0.10.0
libtpu: 0.0.40
codegen_flags: <defaults>
</compile_context>

<pallas_src>
import functools

import jax
import jax.numpy as jnp
from jax.experimental import pallas as pl
from jax.experimental.pallas import tpu as pltpu


def _round_up(x: int, m: int) -> int:
    return (x + m - 1) // m * m


def _general_layer_kernel(x_ref, w_ref, shift_ref, o_ref, acc_ref):
    """One (tm, dim_out) output tile; K is the reduction grid axis (axis 1)."""
    k = pl.program_id(1)

    @pl.when(k == 0)
    def _():
        acc_ref[...] = jnp.zeros_like(acc_ref)

    # MXU matmul in bf16 with f32 accumulation (BN scale already folded into w).
    acc_ref[...] += jnp.dot(
        x_ref[...], w_ref[...], preferred_element_type=jnp.float32
    )

    # Epilogue only on the final K step: BN shift -> ReLU -> row-wise L2 normalize.
    @pl.when(k == pl.num_programs(1) - 1)
    def _():
        y = acc_ref[...] + shift_ref[...]              # folded BN shift (f32)
        y = jnp.maximum(y, 0.0)                        # ReLU
        ss = jnp.sum(y * y, axis=-1, keepdims=True)    # XLU lane reduction
        # F.normalize(p=2, dim=1, eps=1e-12): clamp ||y|| at 1e-12 -> clamp ss at 1e-24.
        inv_norm = jax.lax.rsqrt(jnp.maximum(ss, 1e-24))
        o_ref[...] = (y * inv_norm).astype(o_ref.dtype)


@functools.partial(jax.jit, static_argnames=("tm", "tk", "out_dtype"))
def general_layer_forward(x, weight, gamma, beta, running_mean, running_var,
                          eps=1e-5, *, tm=128, tk=128, out_dtype=jnp.float32):
    """Fused GeneralLayer forward.

    x:       [N, dim_in]            node features
    weight:  [dim_out, dim_in]      PyTorch nn.Linear layout (bias=False)
    gamma, beta, running_mean, running_var: [dim_out]  BatchNorm1d (eval mode)
    """
    N, dim_in = x.shape
    dim_out = weight.shape[0]

    # --- Fold BatchNorm scale into the weight; keep only the per-feature shift. ---
    scale = gamma / jnp.sqrt(running_var + eps)              # (dim_out,)
    shift = beta - running_mean * scale                      # (dim_out,)
    w_folded = (weight * scale[:, None]).T                   # (dim_in, dim_out)

    # --- Pad to TPU-friendly sizes (MXU-aligned tiles, lane-dense output). ---
    # Zero padding is semantics-preserving: padded K contributes 0 to the matmul,
    # padded output features are 0 after ReLU so they don't perturb the L2 norm,
    # padded rows are sliced off at the end.
    Np = _round_up(N, tm)
    Kp = _round_up(dim_in, tk)
    Mp = _round_up(dim_out, 128)

    x_p = jnp.zeros((Np, Kp), jnp.bfloat16).at[:N, :dim_in].set(
        x.astype(jnp.bfloat16))
    w_p = jnp.zeros((Kp, Mp), jnp.bfloat16).at[:dim_in, :dim_out].set(
        w_folded.astype(jnp.bfloat16))
    shift_p = jnp.zeros((1, Mp), jnp.float32).at[0, :dim_out].set(
        shift.astype(jnp.float32))

    grid = (Np // tm, Kp // tk)

    cost = pl.CostEstimate(
        flops=2 * Np * Kp * Mp,
        transcendentals=Np,  # one rsqrt per row
        bytes_accessed=(x_p.size * 2                    # x stream (bf16)
                        + w_p.size * 2 * grid[0]        # weight re-streamed per row tile
                        + shift_p.size * 4
                        + Np * Mp * jnp.dtype(out_dtype).itemsize),
    )

    out = pl.pallas_call(
        _general_layer_kernel,
        out_shape=jax.ShapeDtypeStruct((Np, Mp), out_dtype),
        grid_spec=pltpu.PrefetchScalarGridSpec(
            num_scalar_prefetch=0,
            grid=grid,
            in_specs=[
                pl.BlockSpec((tm, tk), lambda i, k: (i, k)),   # x tile
                pl.BlockSpec((tk, Mp), lambda i, k: (k, 0)),   # weight tile (const in i)
                pl.BlockSpec((1, Mp), lambda i, k: (0, 0)),    # folded BN shift
            ],
            out_specs=pl.BlockSpec((tm, Mp), lambda i, k: (i, 0)),
            scratch_shapes=[pltpu.VMEM((tm, Mp), jnp.float32)],
        ),
        compiler_params=pltpu.CompilerParams(
            dimension_semantics=("parallel", "arbitrary"),
        ),
        cost_estimate=cost,
    )(x_p, w_p, shift_p)

    return out[:N, :dim_out]


def _reference(x, weight, gamma, beta, running_mean, running_var, eps):
    """Pure-JAX reference matching the PyTorch module in eval mode."""
    y = x @ weight.T                                           # Linear, bias=False
    y = (y - running_mean) / jnp.sqrt(running_var + eps) * gamma + beta
    y = jnp.maximum(y, 0.0)                                    # ReLU
    norm = jnp.sqrt(jnp.sum(y * y, axis=1, keepdims=True))
    return y / jnp.maximum(norm, 1e-12)                        # F.normalize(p=2, dim=1)


if __name__ == "__main__":
    key = jax.random.PRNGKey(0)
    N, dim_in, dim_out = 256, 256, 128
    eps = 1e-5

    k1, k2, k3, k4, k5, k6 = jax.random.split(key, 6)
    x = jax.random.normal(k1, (N, dim_in), jnp.float32)
    weight = jax.random.normal(k2, (dim_out, dim_in), jnp.float32) / jnp.sqrt(
        jnp.float32(dim_in))
    gamma = jax.random.uniform(k3, (dim_out,), jnp.float32, 0.5, 1.5)
    beta = 0.1 * jax.random.normal(k4, (dim_out,), jnp.float32)
    running_mean = 0.1 * jax.random.normal(k5, (dim_out,), jnp.float32)
    running_var = jax.random.uniform(k6, (dim_out,), jnp.float32, 0.5, 1.5)

    out = general_layer_forward(x, weight, gamma, beta, running_mean,
                                running_var, eps)
    out = jax.block_until_ready(out)

    ref = _reference(x, weight, gamma, beta, running_mean, running_var, eps)
    max_err = float(jnp.max(jnp.abs(out.astype(jnp.float32) - ref)))
    assert max_err < 3e-2, f"max abs error {max_err} vs reference"

    print("KERNEL_OK")
</pallas_src>

<mosaic_0001>
module attributes {stable_mosaic.version = 11 : i64} {
  func.func @_general_layer_kernel(%arg0: i32, %arg1: i32, %arg2: memref<128x128xbf16, #tpu.memory_space<vmem>>, %arg3: memref<128x128xbf16, #tpu.memory_space<vmem>>, %arg4: memref<1x128xf32, #tpu.memory_space<vmem>>, %arg5: memref<128x128xf32, #tpu.memory_space<vmem>>, %arg6: memref<128x128xf32, #tpu.memory_space<vmem>>) attributes {dimension_semantics = [#tpu.dimension_semantics<parallel>, #tpu.dimension_semantics<arbitrary>], iteration_bounds = array<i64: 2, 2>, scalar_prefetch = 0 : i64, scratch_operands = 1 : i64, tpu.core_type = #tpu.core_type<tc>, window_params = [{transform_indices = @transform_0, window_bounds = array<i64: 128, 128>}, {transform_indices = @transform_1, window_bounds = array<i64: 128, 128>}, {pipeline_mode = #tpu.pipeline_mode<synchronous>, transform_indices = @transform_2, window_bounds = array<i64: 1, 128>}, {transform_indices = @transform_3, window_bounds = array<i64: 128, 128>}]} {
    %c0_i32 = arith.constant 0 : i32
    %0 = arith.cmpi eq, %arg1, %c0_i32 : i32
    %1 = arith.extui %0 : i1 to i32
    %c0_i32_0 = arith.constant 0 : i32
    %2 = arith.cmpi ne, %1, %c0_i32_0 : i32
    scf.if %2 {
      %cst_9 = arith.constant 0.000000e+00 : f32
      %12 = vector.broadcast %cst_9 : f32 to vector<128x128xf32>
      %c0_10 = arith.constant 0 : index
      %c0_11 = arith.constant 0 : index
      %13 = vector.load %arg6[%c0_10, %c0_11] : memref<128x128xf32, #tpu.memory_space<vmem>>, vector<128x128xf32>
      tpu.vector_store %arg6[%c0_10, %c0_11], %12 {strides = array<i32>} : memref<128x128xf32, #tpu.memory_space<vmem>>, vector<128x128xf32>,
    } else {
    }
    %c0 = arith.constant 0 : index
    %c0_1 = arith.constant 0 : index
    %3 = vector.load %arg6[%c0, %c0_1] : memref<128x128xf32, #tpu.memory_space<vmem>>, vector<128x128xf32>
    %c0_2 = arith.constant 0 : index
    %c0_3 = arith.constant 0 : index
    %4 = vector.load %arg2[%c0_2, %c0_3] : memref<128x128xbf16, #tpu.memory_space<vmem>>, vector<128x128xbf16>
    %c0_4 = arith.constant 0 : index
    %c0_5 = arith.constant 0 : index
    %5 = vector.load %arg3[%c0_4, %c0_5] : memref<128x128xbf16, #tpu.memory_space<vmem>>, vector<128x128xbf16>
    %cst = arith.constant dense<0.000000e+00> : vector<128x128xf32>
    %6 = tpu.matmul %4, %5, %cst {dimension_numbers = #tpu.dot_dimension_numbers<[1], [0], [0], [1], [0, 0, 1, 1], [], []>} : vector<128x128xbf16>, vector<128x128xbf16>, vector<128x128xf32> -> vector<128x128xf32>
    %7 = arith.addf %3, %6 : vector<128x128xf32>
    %c0_6 = arith.constant 0 : index
    %c0_7 = arith.constant 0 : index
    %8 = vector.load %arg6[%c0_6, %c0_7] : memref<128x128xf32, #tpu.memory_space<vmem>>, vector<128x128xf32>
    tpu.vector_store %arg6[%c0_6, %c0_7], %7 {strides = array<i32>} : memref<128x128xf32, #tpu.memory_space<vmem>>, vector<128x128xf32>,
    %c1_i32 = arith.constant 1 : i32
    %9 = arith.cmpi eq, %arg1, %c1_i32 : i32
    %10 = arith.extui %9 : i1 to i32
    %c0_i32_8 = arith.constant 0 : i32
    %11 = arith.cmpi ne, %10, %c0_i32_8 : i32
    scf.if %11 {
      %c0_9 = arith.constant 0 : index
      %c0_10 = arith.constant 0 : index
      %12 = vector.load %arg6[%c0_9, %c0_10] : memref<128x128xf32, #tpu.memory_space<vmem>>, vector<128x128xf32>
      %c0_11 = arith.constant 0 : index
      %c0_12 = arith.constant 0 : index
      %13 = vector.load %arg4[%c0_11, %c0_12] : memref<1x128xf32, #tpu.memory_space<vmem>>, vector<1x128xf32>
      %14 = vector.broadcast %13 : vector<1x128xf32> to vector<128x128xf32>
      %15 = arith.addf %12, %14 : vector<128x128xf32>
      %cst_13 = arith.constant 0.000000e+00 : f32
      %16 = vector.broadcast %cst_13 : f32 to vector<128x128xf32>
      %17 = arith.maximumf %15, %16 : vector<128x128xf32>
      %18 = arith.mulf %17, %17 : vector<128x128xf32>
      %cst_14 = arith.constant dense<0.000000e+00> : vector<128xf32>
      %19 = vector.multi_reduction <add>, %18, %cst_14 [1] : vector<128x128xf32> to vector<128xf32>
      %20 = vector.shape_cast %19 : vector<128xf32> to vector<128x1xf32>
      %cst_15 = arith.constant 1.000000e-24 : f32
      %21 = vector.broadcast %cst_15 : f32 to vector<128x1xf32>
      %22 = arith.maximumf %20, %21 : vector<128x1xf32>
      %23 = math.rsqrt %22 : vector<128x1xf32>
      %24 = vector.broadcast %23 : vector<128x1xf32> to vector<128x128xf32>
      %25 = arith.mulf %17, %24 : vector<128x128xf32>
      %c0_16 = arith.constant 0 : index
      %c0_17 = arith.constant 0 : index
      %26 = vector.load %arg5[%c0_16, %c0_17] : memref<128x128xf32, #tpu.memory_space<vmem>>, vector<128x128xf32>
      tpu.vector_store %arg5[%c0_16, %c0_17], %25 {strides = array<i32>} : memref<128x128xf32, #tpu.memory_space<vmem>>, vector<128x128xf32>,
    } else {
    }
    return
  }
  func.func @transform_0(%arg0: i32, %arg1: i32) -> (i32, i32) {
    %c0_i32 = arith.constant 0 : i32
    return %arg0, %arg1 : i32, i32
  }
  func.func @transform_1(%arg0: i32, %arg1: i32) -> (i32, i32) {
    %c0_i32 = arith.constant 0 : i32
    %c0_i32_0 = arith.constant 0 : i32
    return %arg1, %c0_i32 : i32, i32
  }
  func.func @transform_2(%arg0: i32, %arg1: i32) -> (i32, i32) {
    %c0_i32 = arith.constant 0 : i32
    %c0_i32_0 = arith.constant 0 : i32
    %c0_i32_1 = arith.constant 0 : i32
    return %c0_i32, %c0_i32_0 : i32, i32
  }
  func.func @transform_3(%arg0: i32, %arg1: i32) -> (i32, i32) {
    %c0_i32 = arith.constant 0 : i32
    %c0_i32_0 = arith.constant 0 : i32
    return %arg0, %c0_i32 : i32, i32
  }
}

</mosaic_0001>

<llo_original>
// kernel: general_layer_forward.1
$region0: #{general_layer_forward.1}
  #allocation0 [shape = 'u32[]', space=smem, size = 0x4, offset = 0x4, fixed_abs, tag = 'smem constant byte address 0x4 - core index']
  #allocation1 [shape = 'u32[72,128]{1,0:T(1,128)}', space=vmem, size = 0x9000, scoped, tag = 'internal scratch']
  #allocation2 [shape = 'f32[128,128]{1,0:T(8,128)}', space=vmem, size = 0x10000, scoped, tag = 'scratch operand']
  %s0 = inlined_call_operand.vmem [shape: bf16[256,256], index: 0, kind: input, shape index: {}]
  %s1 = inlined_call_operand.vmem [shape: bf16[256,128], index: 1, kind: input, shape index: {}]
  %s2 = inlined_call_operand.vmem [shape: f32[1,128], index: 2, kind: input, shape index: {}]
  %s3 = inlined_call_operand.hbm [shape: f32[256,128], index: 3, kind: output, shape index: {}]
  %s4 = sld [smem:[#allocation0]]
  $region94: #{general_layer_forward.1} parent=0
    _
  %s6 = ssub.s32 1, %s4
  %s7 = scalar_select 0, %s6, %s4
  $region1: #{general_layer_forward.1} parent=0
    #allocation3 [shape = 'u8[65536]{0}', space=vmem, size = 0x10000, scoped, tag = 'input window, operand 0']
    #allocation4 [shape = 'u8[131072]{0}', space=vmem, size = 0x20000, scoped, tag = 'output window, operand 0']
    #allocation5 [shape = 's32[2]{0}', space=sflag, size = 0x8, scoped, tag = 'scoped memory for general_layer_forward.1']
    %8 = vsyncpa [#allocation5], 0
    %s9 = scalar_lea.sflag [#allocation5], 1
    %10 = vsyncpa %s9, 0
    loop: start=0, step=1, limit=6
    $region2: #{general_layer_forward.1} parent=1 // loop_pre_header
      _
    $region3: #{general_layer_forward.1} parent=1 // loop_header
      %s12 = sphi 0, %s16
      %p13 = scmp.ge.s32.totalorder %s12, 6
      %s19 = sphi 0, %s31
      %s20 = sphi 0, %s27
      %s21 = sphi 0, %s19
      %s22 = sphi 0, %s20
      %s23 = sphi 0, %s21
      %s24 = sphi 0, %s22
      %s36 = sphi 0, %s38
      %s39 = sphi 0, %s36
      %s40 = sphi 0, %s39
      %s56 = sphi 0, %s40
      %s62 = sphi 0, %s64
      %s65 = sphi 0, %s62
      %s66 = sphi 0, %s65
      %s82 = sphi 0, %s66
      %s86 = sphi 0, %s86
      %s88 = sphi 0, %s86
      %s89 = sphi 0, %s88
      %s103 = sphi 0, %s89
      %s109 = sphi 0, %s111
      %s112 = sphi 0, %s109
      %s113 = sphi 0, %s112
      %s129 = sphi 0, %s113
    $region4: #{general_layer_forward.1} parent=1 // loop_header_branch
      %15 = sbr.rel (%p13) target = $region8
    $region5: #{general_layer_forward.1} parent=1 // loop_body
      %s17 = ssub.s32 %s12, 1
      %s18 = ssub.s32 %s12, 2
      %s25 = sadd.s32 1, %s20
      %p26 = scmp.ge.s32.totalorder %s25, 2
      %s27 = scalar_select %p26, 0, %s25
      %s28 = sadd.s32 1, %s19
      %s29 = scalar_select %p26, %s28, %s19
      %p30 = scmp.ge.s32.totalorder %s29, 2
      %s31 = scalar_select %p30, 0, %s29
      %s32 = ssub.s32 %s19, %s31
      %s33 = ssub.s32 %s20, %s27
      %s34 = sor.u32 %s32, %s33
      %p35 = scmp.eq.s32.totalorder %s34, 0
      %s37 = sadd.s32 %s36, 1
      %s38 = scalar_select %p35, %s36, %s37
      %p41 = pneg %p35
      %p42 = scmp.eq.s32.totalorder %s12, 3
      %p43 = por %p41, %p42
      %p44 = scmp.ne.s32.totalorder %s36, %s39
      %p45 = scmp.eq.s32.totalorder %s12, 0
      %p46 = por %p44, %p45
      %p47 = scmp.ne.s32.totalorder %s36, %s39
      %p48 = scmp.eq.s32.totalorder %s17, 3
      %p49 = por %p47, %p48
      %p50 = scmp.ne.s32.totalorder %s39, %s40
      %p51 = scmp.eq.s32.totalorder %s17, 0
      %p52 = por %p50, %p51
      %p53 = scmp.ne.s32.totalorder %s39, %s40
      %p54 = scmp.eq.s32.totalorder %s18, 3
      %p55 = por %p53, %p54
      %p57 = scmp.ne.s32.totalorder %s40, %s56
      %p58 = scmp.eq.s32.totalorder %s18, 0
      %p59 = por %p57, %p58
      %s60 = ssub.s32 %s20, %s27
      %p61 = scmp.eq.s32.totalorder %s60, 0
      %s63 = sadd.s32 %s62, 1
      %s64 = scalar_select %p61, %s62, %s63
      %p67 = pneg %p61
      %p68 = scmp.eq.s32.totalorder %s12, 3
      %p69 = por %p67, %p68
      %p70 = scmp.ne.s32.totalorder %s62, %s65
      %p71 = scmp.eq.s32.totalorder %s12, 0
      %p72 = por %p70, %p71
      %p73 = scmp.ne.s32.totalorder %s62, %s65
      %p74 = scmp.eq.s32.totalorder %s17, 3
      %p75 = por %p73, %p74
      %p76 = scmp.ne.s32.totalorder %s65, %s66
      %p77 = scmp.eq.s32.totalorder %s17, 0
      %p78 = por %p76, %p77
      %p79 = scmp.ne.s32.totalorder %s65, %s66
      %p80 = scmp.eq.s32.totalorder %s18, 3
      %p81 = por %p79, %p80
      %p83 = scmp.ne.s32.totalorder %s66, %s82
      %p84 = scmp.eq.s32.totalorder %s18, 0
      %p85 = por %p83, %p84
      %s87 = sadd.s32 %s86, 1
      %p90 = scmp.eq.s32.totalorder %s12, 3
      %p91 = scmp.ne.s32.totalorder %s86, %s88
      %p92 = scmp.eq.s32.totalorder %s12, 0
      %p93 = por %p91, %p92
      %p94 = scmp.ne.s32.totalorder %s86, %s88
      %p95 = scmp.eq.s32.totalorder %s17, 3
      %p96 = por %p94, %p95
      %p97 = scmp.ne.s32.totalorder %s88, %s89
      %p98 = scmp.eq.s32.totalorder %s17, 0
      %p99 = por %p97, %p98
      %p100 = scmp.ne.s32.totalorder %s88, %s89
      %p101 = scmp.eq.s32.totalorder %s18, 3
      %p102 = por %p100, %p101
      %p104 = scmp.ne.s32.totalorder %s89, %s103
      %p105 = scmp.eq.s32.totalorder %s18, 0
      %p106 = por %p104, %p105
      %s107 = ssub.s32 %s19, %s31
      %p108 = scmp.eq.s32.totalorder %s107, 0
      %s110 = sadd.s32 %s109, 1
      %s111 = scalar_select %p108, %s109, %s110
      %p114 = pneg %p108
      %p115 = scmp.eq.s32.totalorder %s12, 3
      %p116 = por %p114, %p115
      %p117 = scmp.ne.s32.totalorder %s109, %s112
      %p118 = scmp.eq.s32.totalorder %s12, 0
      %p119 = por %p117, %p118
      %p120 = scmp.ne.s32.totalorder %s109, %s112
      %p121 = scmp.eq.s32.totalorder %s17, 3
      %p122 = por %p120, %p121
      %p123 = scmp.ne.s32.totalorder %s112, %s113
      %p124 = scmp.eq.s32.totalorder %s17, 0
      %p125 = por %p123, %p124
      %p126 = scmp.ne.s32.totalorder %s112, %s113
      %p127 = scmp.eq.s32.totalorder %s18, 3
      %p128 = por %p126, %p127
      %p130 = scmp.ne.s32.totalorder %s113, %s129
      %p131 = scmp.eq.s32.totalorder %s18, 0
      %p132 = por %p130, %p131
      %p133 = scmp.le.s32.totalorder 1, %s12
      %p134 = scmp.lt.s32.totalorder %s12, 5
      %p135 = pnand %p133, %p134
      %p136 = pneg %p135
      // Predicated region
      $region9: #{general_layer_forward.1} parent=5 // pred_check
        _
      $region10: #{general_layer_forward.1} parent=5 // pred_check_branch
        %138 = sbr.rel (%p135) target = $region12
      $region11: #{general_layer_forward.1} parent=5 // pred_region
        %s139 = ssub.s32 %s12, 1
        // Predicated region
        $region13: #{general_layer_forward.1} parent=11 // pred_check
          %p140 = pneg %p99
        $region14: #{general_layer_forward.1} parent=11 // pred_check_branch
          %142 = sbr.rel (%p140) target = $region16
        $region15: #{general_layer_forward.1} parent=11 // pred_region
          _
        $region16: #{general_layer_forward.1} parent=11 // pred_fallthru
          _
      $region12: #{general_layer_forward.1} parent=5 // pred_fallthru
        _
      %p143 = scmp.lt.s32.totalorder %s12, 4
      // Predicated region
      $region17: #{general_layer_forward.1} parent=5 // pred_check
        %p144 = pneg %p143
      $region18: #{general_layer_forward.1} parent=5 // pred_check_branch
        %146 = sbr.rel (%p144) target = $region20
      $region19: #{general_layer_forward.1} parent=5 // pred_region
        // Predicated region
        $region21: #{general_layer_forward.1} parent=19 // pred_check
          %p147 = pneg %p46
        $region22: #{general_layer_forward.1} parent=19 // pred_check_branch
          %149 = sbr.rel (%p147) target = $region24
        $region23: #{general_layer_forward.1} parent=19 // pred_region
          %s150 = sand.u32 %s36, 1
          %s151 = sand.u32 %s36, 1
          %s152 = smul.addr %s151, 64
          %s153 = scalar_lea.vmem [#allocation3], %s152
          %s154 = smul.u32 16, %s19
          %s155 = smul.addr %s154, 2
          %s156 = sadd.s32 %s20, %s155
          %s157 = smul.addr %s156, 4
          %s158 = scalar_lea.vmem %s0, %s157
          // Predicated region
          $region25: #{general_layer_forward.1} parent=23 // pred_check
            _
          $region26: #{general_layer_forward.1} parent=23 // pred_check_branch
            %160 = sbr.rel (0) target = $region28
          $region27: #{general_layer_forward.1} parent=23 // pred_region
            // Predicated region
            $region29: #{general_layer_forward.1} parent=27 // pred_check
              _
            $region30: #{general_layer_forward.1} parent=27 // pred_check_branch
              %162 = sbr.rel target = $region32
            $region31: #{general_layer_forward.1} parent=27 // pred_region
              // Predicated region
              $region44: #{general_layer_forward.1} parent=31 // pred_check
                _
              $region45: #{general_layer_forward.1} parent=31 // pred_check_branch
                %208 = sbr.rel (0) target = $region47
              $region46: #{general_layer_forward.1} parent=31 // pred_region
                loop: start=0, step=1, limit=1
                $region48: #{general_layer_forward.1} parent=46 // loop_pre_header
                  _
                $region49: #{general_layer_forward.1} parent=46 // loop_header
                  %s210 = sphi 0, %s214
                  %p211 = scmp.ge.s32.totalorder %s210, 1
                  %s215 = sphi %s158, %s158
                  %s216 = sphi %s153, %s153
                $region50: #{general_layer_forward.1} parent=46 // loop_header_branch
                  %213 = sbr.rel (%p211) target = $region54
                $region51: #{general_layer_forward.1} parent=46 // loop_body
                  _
                $region52: #{general_layer_forward.1} parent=46 // loop_footer
                  %s214 = sadd.s32 1, %s210
                $region53: #{general_layer_forward.1} parent=46 // loop_footer_branch
                  %209 = sbr.rel target = $region49
                $region54: #{general_layer_forward.1} parent=46 // loop_exit
                  _
                %s218 = ssub.s32 16, 1
                loop: start=0, step=1, limit=1
                $region55: #{general_layer_forward.1} parent=46 // loop_pre_header
                  _
                $region56: #{general_layer_forward.1} parent=46 // loop_header
                  %s220 = sphi 0, %s224
                  %p221 = scmp.ge.s32.totalorder %s220, 1
                  %s225 = sphi %s158, %s158
                  %s226 = sphi %s153, %s153
                $region57: #{general_layer_forward.1} parent=46 // loop_header_branch
                  %223 = sbr.rel (%p221) target = $region61
                $region58: #{general_layer_forward.1} parent=46 // loop_body
                  %v227 = vld [vmem:[%s225] sm:%s218]
                  %228 = vst [vmem:[%s226] sm:%s218] %v227
                  %v229 = vld [vmem:[%s225 + $0x8] sm:%s218]
                  %230 = vst [vmem:[%s226 + $0x4] sm:%s218] %v229
                  %v231 = vld [vmem:[%s225 + $0x10] sm:%s218]
                  %232 = vst [vmem:[%s226 + $0x8] sm:%s218] %v231
                  %v233 = vld [vmem:[%s225 + $0x18] sm:%s218]
                  %234 = vst [vmem:[%s226 + $0xc] sm:%s218] %v233
                  %v235 = vld [vmem:[%s225 + $0x20] sm:%s218]
                  %236 = vst [vmem:[%s226 + $0x10] sm:%s218] %v235
                  %v237 = vld [vmem:[%s225 + $0x28] sm:%s218]
                  %238 = vst [vmem:[%s226 + $0x14] sm:%s218] %v237
                  %v239 = vld [vmem:[%s225 + $0x30] sm:%s218]
                  %240 = vst [vmem:[%s226 + $0x18] sm:%s218] %v239
                  %v241 = vld [vmem:[%s225 + $0x38] sm:%s218]
                  %242 = vst [vmem:[%s226 + $0x1c] sm:%s218] %v241
                  %v243 = vld [vmem:[%s225 + $0x40] sm:%s218]
                  %244 = vst [vmem:[%s226 + $0x20] sm:%s218] %v243
                  %v245 = vld [vmem:[%s225 + $0x48] sm:%s218]
                  %246 = vst [vmem:[%s226 + $0x24] sm:%s218] %v245
                  %v247 = vld [vmem:[%s225 + $0x50] sm:%s218]
                  %248 = vst [vmem:[%s226 + $0x28] sm:%s218] %v247
                  %v249 = vld [vmem:[%s225 + $0x58] sm:%s218]
                  %250 = vst [vmem:[%s226 + $0x2c] sm:%s218] %v249
                  %v251 = vld [vmem:[%s225 + $0x60] sm:%s218]
                  %252 = vst [vmem:[%s226 + $0x30] sm:%s218] %v251
                  %v253 = vld [vmem:[%s225 + $0x68] sm:%s218]
                  %254 = vst [vmem:[%s226 + $0x34] sm:%s218] %v253
                  %v255 = vld [vmem:[%s225 + $0x70] sm:%s218]
                  %256 = vst [vmem:[%s226 + $0x38] sm:%s218] %v255
                  %v257 = vld [vmem:[%s225 + $0x78] sm:%s218]
                  %258 = vst [vmem:[%s226 + $0x3c] sm:%s218] %v257
                $region59: #{general_layer_forward.1} parent=46 // loop_footer
                  %s224 = sadd.s32 1, %s220
                $region60: #{general_layer_forward.1} parent=46 // loop_footer_branch
                  %219 = sbr.rel target = $region56
                $region61: #{general_layer_forward.1} parent=46 // loop_exit
                  _
              $region47: #{general_layer_forward.1} parent=31 // pred_fallthru
                _
            $region32: #{general_layer_forward.1} parent=27 // pred_fallthru
              _
            // Predicated region
            $region33: #{general_layer_forward.1} parent=27 // pred_check
              _
            $region34: #{general_layer_forward.1} parent=27 // pred_check_branch
              %164 = sbr.rel (0) target = $region36
            $region35: #{general_layer_forward.1} parent=27 // pred_region
              %s166 = ssub.s32 16, 1
              loop: start=0, step=1, limit=1
              $region37: #{general_layer_forward.1} parent=35 // loop_pre_header
                _
              $region38: #{general_layer_forward.1} parent=35 // loop_header
                %s168 = sphi 0, %s172
                %p169 = scmp.ge.s32.totalorder %s168, 1
                %s173 = sphi %s158, %s158
                %s174 = sphi %s153, %s153
              $region39: #{general_layer_forward.1} parent=35 // loop_header_branch
                %171 = sbr.rel (%p169) target = $region43
              $region40: #{general_layer_forward.1} parent=35 // loop_body
                %v175 = vld [vmem:[%s173] sm:%s166]
                %176 = vst [vmem:[%s174] sm:%s166] %v175
                %v177 = vld [vmem:[%s173 + $0x8] sm:%s166]
                %178 = vst [vmem:[%s174 + $0x4] sm:%s166] %v177
                %v179 = vld [vmem:[%s173 + $0x10] sm:%s166]
                %180 = vst [vmem:[%s174 + $0x8] sm:%s166] %v179
                %v181 = vld [vmem:[%s173 + $0x18] sm:%s166]
                %182 = vst [vmem:[%s174 + $0xc] sm:%s166] %v181
                %v183 = vld [vmem:[%s173 + $0x20] sm:%s166]
                %184 = vst [vmem:[%s174 + $0x10] sm:%s166] %v183
                %v185 = vld [vmem:[%s173 + $0x28] sm:%s166]
                %186 = vst [vmem:[%s174 + $0x14] sm:%s166] %v185
                %v187 = vld [vmem:[%s173 + $0x30] sm:%s166]
                %188 = vst [vmem:[%s174 + $0x18] sm:%s166] %v187
                %v189 = vld [vmem:[%s173 + $0x38] sm:%s166]
                %190 = vst [vmem:[%s174 + $0x1c] sm:%s166] %v189
                %v191 = vld [vmem:[%s173 + $0x40] sm:%s166]
                %192 = vst [vmem:[%s174 + $0x20] sm:%s166] %v191
                %v193 = vld [vmem:[%s173 + $0x48] sm:%s166]
                %194 = vst [vmem:[%s174 + $0x24] sm:%s166] %v193
                %v195 = vld [vmem:[%s173 + $0x50] sm:%s166]
                %196 = vst [vmem:[%s174 + $0x28] sm:%s166] %v195
                %v197 = vld [vmem:[%s173 + $0x58] sm:%s166]
                %198 = vst [vmem:[%s174 + $0x2c] sm:%s166] %v197
                %v199 = vld [vmem:[%s173 + $0x60] sm:%s166]
                %200 = vst [vmem:[%s174 + $0x30] sm:%s166] %v199
                %v201 = vld [vmem:[%s173 + $0x68] sm:%s166]
                %202 = vst [vmem:[%s174 + $0x34] sm:%s166] %v201
                %v203 = vld [vmem:[%s173 + $0x70] sm:%s166]
                %204 = vst [vmem:[%s174 + $0x38] sm:%s166] %v203
                %v205 = vld [vmem:[%s173 + $0x78] sm:%s166]
                %206 = vst [vmem:[%s174 + $0x3c] sm:%s166] %v205
              $region41: #{general_layer_forward.1} parent=35 // loop_footer
                %s172 = sadd.s32 1, %s168
              $region42: #{general_layer_forward.1} parent=35 // loop_footer_branch
                %167 = sbr.rel target = $region38
              $region43: #{general_layer_forward.1} parent=35 // loop_exit
                _
            $region36: #{general_layer_forward.1} parent=27 // pred_fallthru
              _
          $region28: #{general_layer_forward.1} parent=23 // pred_fallthru
            _
          %259 = vnop
        $region24: #{general_layer_forward.1} parent=19 // pred_fallthru
          _
        // Predicated region
        $region62: #{general_layer_forward.1} parent=19 // pred_check
          %p260 = pneg %p72
        $region63: #{general_layer_forward.1} parent=19 // pred_check_branch
          %262 = sbr.rel (%p260) target = $region65
        $region64: #{general_layer_forward.1} parent=19 // pred_region
          %s263 = smul.u32 16, %s20
          %p264 = scmp.lt.s32.totalorder %s263, 31
          %s265 = scalar_select %p264, %s263, 31
          %s266 = smul.addr %s265, 4
          %s267 = scalar_lea.vmem %s1, %s266
          %s268 = smul.u32 16, %s20
        $region65: #{general_layer_forward.1} parent=19 // pred_fallthru
          _
      $region20: #{general_layer_forward.1} parent=5 // pred_fallthru
        _
      %p269 = scmp.le.s32.totalorder 1, %s12
      %p270 = scmp.lt.s32.totalorder %s12, 5
      %p271 = pnand %p269, %p270
      %p272 = pneg %p271
      // Predicated region
      $region66: #{general_layer_forward.1} parent=5 // pred_check
        _
      $region67: #{general_layer_forward.1} parent=5 // pred_check_branch
        %274 = sbr.rel (%p271) target = $region69
      $region68: #{general_layer_forward.1} parent=5 // pred_region
        %s275 = ssub.s32 %s12, 1
        %s276 = sand.u32 %s39, 1
        %s277 = sand.u32 %s39, 1
        %s278 = smul.addr %s277, 64
        %s279 = scalar_lea.vmem [#allocation3], %s278
        // Predicated region
        $region70: #{general_layer_forward.1} parent=68 // pred_check
          %p280 = pneg %p52
        $region71: #{general_layer_forward.1} parent=68 // pred_check_branch
          %282 = sbr.rel (%p280) target = $region73
        $region72: #{general_layer_forward.1} parent=68 // pred_region
          _
        $region73: #{general_layer_forward.1} parent=68 // pred_fallthru
          _
        %s283 = sand.u32 %s39, 1
        %s284 = sand.u32 %s39, 1
        %s285 = smul.addr %s284, 64
        %s286 = scalar_lea.vmem [#allocation3], %s285
        %p287 = pneg %p52
        %p288 = pneg %p49
        %s289 = smul.u32 16, %s22
        %p290 = scmp.lt.s32.totalorder %s289, 31
        %s291 = scalar_select %p290, %s289, 31
        %s292 = smul.addr %s291, 4
        %s293 = scalar_lea.vmem %s1, %s292
        %p294 = pneg %p78
        %p295 = pneg %p75
        %p296 = pneg %p99
        %p297 = pneg %p96
        %p298 = pneg %p125
        %p299 = pneg %p122
        %s300 = sand.u32 %s112, 1
        %s301 = scalar_lea.sflag [#allocation5], %s300
        %s302 = sand.u32 %s112, 1
        %s303 = smul.addr %s302, 128
        %s304 = scalar_lea.vmem [#allocation4], %s303
        %s305 = smul.u32 16, %s21
        %s306 = smul.u32 16, %s22
        %p307 = scmp.lt.s32.totalorder %s306, 31
        %s308 = scalar_select %p307, %s306, 31
        %s309 = smul.addr %s308, 4
        %s310 = scalar_lea.vmem %s1, %s309
        %s311 = smul.u32 16, %s22
        %s312 = smul.u32 16, %s21
        %p313 = scmp.eq.s32.totalorder %s22, 0
        // Predicated region
        $region74: #{general_layer_forward.1} parent=68 // pred_check
          %p314 = pneg %p313
        $region75: #{general_layer_forward.1} parent=68 // pred_check_branch
          %316 = sbr.rel (%p314) target = $region77
        $region76: #{general_layer_forward.1} parent=68 // pred_region
          %317 = vst [vmem:[#allocation2] sm:$0xff] 0.0
          %318 = vst [vmem:[#allocation2 + $0x8] sm:$0xff] 0.0
          %319 = vst [vmem:[#allocation2 + $0x10] sm:$0xff] 0.0
          %320 = vst [vmem:[#allocation2 + $0x18] sm:$0xff] 0.0
          %321 = vst [vmem:[#allocation2 + $0x20] sm:$0xff] 0.0
          %322 = vst [vmem:[#allocation2 + $0x28] sm:$0xff] 0.0
          %323 = vst [vmem:[#allocation2 + $0x30] sm:$0xff] 0.0
          %324 = vst [vmem:[#allocation2 + $0x38] sm:$0xff] 0.0
          %325 = vst [vmem:[#allocation2 + $0x40] sm:$0xff] 0.0
          %326 = vst [vmem:[#allocation2 + $0x48] sm:$0xff] 0.0
          %327 = vst [vmem:[#allocation2 + $0x50] sm:$0xff] 0.0
          %328 = vst [vmem:[#allocation2 + $0x58] sm:$0xff] 0.0
          %329 = vst [vmem:[#allocation2 + $0x60] sm:$0xff] 0.0
          %330 = vst [vmem:[#allocation2 + $0x68] sm:$0xff] 0.0
          %331 = vst [vmem:[#allocation2 + $0x70] sm:$0xff] 0.0
          %332 = vst [vmem:[#allocation2 + $0x78] sm:$0xff] 0.0
        $region77: #{general_layer_forward.1} parent=68 // pred_fallthru
          _
        %v333 = vld [vmem:[#allocation2] sm:$0xff]
        %v334 = vld [vmem:[#allocation2 + $0x8] sm:$0xff]
        %v335 = vld [vmem:[#allocation2 + $0x10] sm:$0xff]
        %v336 = vld [vmem:[#allocation2 + $0x18] sm:$0xff]
        %v337 = vld [vmem:[#allocation2 + $0x20] sm:$0xff]
        %v338 = vld [vmem:[#allocation2 + $0x28] sm:$0xff]
        %v339 = vld [vmem:[#allocation2 + $0x30] sm:$0xff]
        %v340 = vld [vmem:[#allocation2 + $0x38] sm:$0xff]
        %v341 = vld [vmem:[#allocation2 + $0x40] sm:$0xff]
        %v342 = vld [vmem:[#allocation2 + $0x48] sm:$0xff]
        %v343 = vld [vmem:[#allocation2 + $0x50] sm:$0xff]
        %v344 = vld [vmem:[#allocation2 + $0x58] sm:$0xff]
        %v345 = vld [vmem:[#allocation2 + $0x60] sm:$0xff]
        %v346 = vld [vmem:[#allocation2 + $0x68] sm:$0xff]
        %v347 = vld [vmem:[#allocation2 + $0x70] sm:$0xff]
        %v348 = vld [vmem:[#allocation2 + $0x78] sm:$0xff]
        %v349 = vld [vmem:[%s279] sm:$0xf]
        %v350 = vld [vmem:[%s279 + $0x4] sm:$0xf]
        %v351 = vld [vmem:[%s279 + $0x8] sm:$0xf]
        %v352 = vld [vmem:[%s279 + $0xc] sm:$0xf]
        %v353 = vld [vmem:[%s279 + $0x10] sm:$0xf]
        %v354 = vld [vmem:[%s279 + $0x14] sm:$0xf]
        %v355 = vld [vmem:[%s279 + $0x18] sm:$0xf]
        %v356 = vld [vmem:[%s279 + $0x1c] sm:$0xf]
        %v357 = vld [vmem:[%s279 + $0x20] sm:$0xf]
        %v358 = vld [vmem:[%s279 + $0x24] sm:$0xf]
        %v359 = vld [vmem:[%s279 + $0x28] sm:$0xf]
        %v360 = vld [vmem:[%s279 + $0x2c] sm:$0xf]
        %v361 = vld [vmem:[%s279 + $0x30] sm:$0xf]
        %v362 = vld [vmem:[%s279 + $0x34] sm:$0xf]
        %v363 = vld [vmem:[%s279 + $0x38] sm:$0xf]
        %v364 = vld [vmem:[%s279 + $0x3c] sm:$0xf]
        %v365 = vld [vmem:[%s310] sm:$0xf]
        %v366 = vld [vmem:[%s310 + $0x4] sm:$0xf]
        %v367 = vld [vmem:[%s310 + $0x8] sm:$0xf]
        %v368 = vld [vmem:[%s310 + $0xc] sm:$0xf]
        %v369 = vld [vmem:[%s310 + $0x10] sm:$0xf]
        %v370 = vld [vmem:[%s310 + $0x14] sm:$0xf]
        %v371 = vld [vmem:[%s310 + $0x18] sm:$0xf]
        %v372 = vld [vmem:[%s310 + $0x1c] sm:$0xf]
        %v373 = vld [vmem:[%s310 + $0x20] sm:$0xf]
        %v374 = vld [vmem:[%s310 + $0x24] sm:$0xf]
        %v375 = vld [vmem:[%s310 + $0x28] sm:$0xf]
        %v376 = vld [vmem:[%s310 + $0x2c] sm:$0xf]
        %v377 = vld [vmem:[%s310 + $0x30] sm:$0xf]
        %v378 = vld [vmem:[%s310 + $0x34] sm:$0xf]
        %v379 = vld [vmem:[%s310 + $0x38] sm:$0xf]
        %v380 = vld [vmem:[%s310 + $0x3c] sm:$0xf]
        %v397 = vunpack.c.l.b16 %v349
        %v398 = vunpack.c.l.b16 %v350
        %v399 = vunpack.c.l.b16 %v351
        %v400 = vunpack.c.l.b16 %v352
        %v401 = vunpack.c.l.b16 %v353
        %v402 = vunpack.c.l.b16 %v354
        %v403 = vunpack.c.l.b16 %v355
        %v404 = vunpack.c.l.b16 %v356
        %v405 = vunpack.c.l.b16 %v357
        %v406 = vunpack.c.l.b16 %v358
        %v407 = vunpack.c.l.b16 %v359
        %v408 = vunpack.c.l.b16 %v360
        %v409 = vunpack.c.l.b16 %v361
        %v410 = vunpack.c.l.b16 %v362
        %v411 = vunpack.c.l.b16 %v363
        %v412 = vunpack.c.l.b16 %v364
        %v413 = vpack.c.b16 %v398, %v397
        %v414 = vpack.c.b16 %v400, %v399
        %v415 = vpack.c.b16 %v402, %v401
        %v416 = vpack.c.b16 %v404, %v403
        %v417 = vpack.c.b16 %v406, %v405
        %v418 = vpack.c.b16 %v408, %v407
        %v419 = vpack.c.b16 %v410, %v409
        %v420 = vpack.c.b16 %v412, %v411
        %v445 = vunpack.c.l.b16 %v365
        %v446 = vunpack.c.l.b16 %v366
        %v447 = vunpack.c.l.b16 %v367
        %v448 = vunpack.c.l.b16 %v368
        %v449 = vunpack.c.l.b16 %v369
        %v450 = vunpack.c.l.b16 %v370
        %v451 = vunpack.c.l.b16 %v371
        %v452 = vunpack.c.l.b16 %v372
        %v453 = vunpack.c.l.b16 %v373
        %v454 = vunpack.c.l.b16 %v374
        %v455 = vunpack.c.l.b16 %v375
        %v456 = vunpack.c.l.b16 %v376
        %v457 = vunpack.c.l.b16 %v377
        %v458 = vunpack.c.l.b16 %v378
        %v459 = vunpack.c.l.b16 %v379
        %v460 = vunpack.c.l.b16 %v380
        %v461 = vpack.c.b16 %v446, %v445
        %v462 = vpack.c.b16 %v448, %v447
        %v463 = vpack.c.b16 %v450, %v449
        %v464 = vpack.c.b16 %v452, %v451
        %v465 = vpack.c.b16 %v454, %v453
        %v466 = vpack.c.b16 %v456, %v455
        %v467 = vpack.c.b16 %v458, %v457
        %v468 = vpack.c.b16 %v460, %v459
        %477 = vmatpush.bf16.msra.mxu0 %v468
        %478 = vmatpush.bf16.msra.mxu0 %v467
        %479 = vmatpush.bf16.msra.mxu0 %v466
        %480 = vmatpush.bf16.msra.mxu0 %v465
        %481 = vmatpush.bf16.msra.mxu0 %v464
        %482 = vmatpush.bf16.msra.mxu0 %v463
        %483 = vmatpush.bf16.msra.mxu0 %v462
        %484 = vmatpush.bf16.msra.mxu0 %v461
        %485 = vmatmul.bf16.gmra.mxu0 %v413
        %v486 = vpop.f32.mrf.mxu0
        %v487 = vadd.f32 0.0, %v486
        %v488 = vpop.f32.mrf.mxu0
        %v489 = vadd.f32 0.0, %v488
        %490 = vmatmul.bf16.gmra.mxu0 %v414
        %v491 = vpop.f32.mrf.mxu0
        %v492 = vadd.f32 0.0, %v491
        %v493 = vpop.f32.mrf.mxu0
        %v494 = vadd.f32 0.0, %v493
        %495 = vmatmul.bf16.gmra.mxu0 %v415
        %v496 = vpop.f32.mrf.mxu0
        %v497 = vadd.f32 0.0, %v496
        %v498 = vpop.f32.mrf.mxu0
        %v499 = vadd.f32 0.0, %v498
        %500 = vmatmul.bf16.gmra.mxu0 %v416
        %v501 = vpop.f32.mrf.mxu0
        %v502 = vadd.f32 0.0, %v501
        %v503 = vpop.f32.mrf.mxu0
        %v504 = vadd.f32 0.0, %v503
        %505 = vmatmul.bf16.gmra.mxu0 %v417
        %v506 = vpop.f32.mrf.mxu0
        %v507 = vadd.f32 0.0, %v506
        %v508 = vpop.f32.mrf.mxu0
        %v509 = vadd.f32 0.0, %v508
        %510 = vmatmul.bf16.gmra.mxu0 %v418
        %v511 = vpop.f32.mrf.mxu0
        %v512 = vadd.f32 0.0, %v511
        %v513 = vpop.f32.mrf.mxu0
        %v514 = vadd.f32 0.0, %v513
        %515 = vmatmul.bf16.gmra.mxu0 %v419
        %v516 = vpop.f32.mrf.mxu0
        %v517 = vadd.f32 0.0, %v516
        %v518 = vpop.f32.mrf.mxu0
        %v519 = vadd.f32 0.0, %v518
        %520 = vmatmul.bf16.gmra.mxu0 %v420
        %v521 = vpop.f32.mrf.mxu0
        %v522 = vadd.f32 0.0, %v521
        %v523 = vpop.f32.mrf.mxu0
        %v524 = vadd.f32 0.0, %v523
        %525 = vdwg.mxu0
        %v526 = vadd.f32 %v333, %v487
        %v527 = vadd.f32 %v334, %v489
        %v528 = vadd.f32 %v335, %v492
        %v529 = vadd.f32 %v336, %v494
        %v530 = vadd.f32 %v337, %v497
        %v531 = vadd.f32 %v338, %v499
        %v532 = vadd.f32 %v339, %v502
        %v533 = vadd.f32 %v340, %v504
        %v534 = vadd.f32 %v341, %v507
        %v535 = vadd.f32 %v342, %v509
        %v536 = vadd.f32 %v343, %v512
        %v537 = vadd.f32 %v344, %v514
        %v538 = vadd.f32 %v345, %v517
        %v539 = vadd.f32 %v346, %v519
        %v540 = vadd.f32 %v347, %v522
        %v541 = vadd.f32 %v348, %v524
        %542 = vst [vmem:[#allocation2] sm:$0xff] %v526
        %543 = vst [vmem:[#allocation2 + $0x8] sm:$0xff] %v527
        %544 = vst [vmem:[#allocation2 + $0x10] sm:$0xff] %v528
        %545 = vst [vmem:[#allocation2 + $0x18] sm:$0xff] %v529
        %546 = vst [vmem:[#allocation2 + $0x20] sm:$0xff] %v530
        %547 = vst [vmem:[#allocation2 + $0x28] sm:$0xff] %v531
        %548 = vst [vmem:[#allocation2 + $0x30] sm:$0xff] %v532
        %549 = vst [vmem:[#allocation2 + $0x38] sm:$0xff] %v533
        %550 = vst [vmem:[#allocation2 + $0x40] sm:$0xff] %v534
        %551 = vst [vmem:[#allocation2 + $0x48] sm:$0xff] %v535
        %552 = vst [vmem:[#allocation2 + $0x50] sm:$0xff] %v536
        %553 = vst [vmem:[#allocation2 + $0x58] sm:$0xff] %v537
        %554 = vst [vmem:[#allocation2 + $0x60] sm:$0xff] %v538
        %555 = vst [vmem:[#allocation2 + $0x68] sm:$0xff] %v539
        %556 = vst [vmem:[#allocation2 + $0x70] sm:$0xff] %v540
        %557 = vst [vmem:[#allocation2 + $0x78] sm:$0xff] %v541
        %p558 = scmp.eq.s32.totalorder %s22, 1
        // Predicated region
        $region78: #{general_layer_forward.1} parent=68 // pred_check
          %p559 = pneg %p558
        $region79: #{general_layer_forward.1} parent=68 // pred_check_branch
          %561 = sbr.rel (%p559) target = $region81
        $region80: #{general_layer_forward.1} parent=68 // pred_region
          %v562 = vld [vmem:[#allocation2] sm:$0xff]
          %v563 = vld [vmem:[#allocation2 + $0x8] sm:$0xff]
          %v564 = vld [vmem:[#allocation2 + $0x10] sm:$0xff]
          %v565 = vld [vmem:[#allocation2 + $0x18] sm:$0xff]
          %v566 = vld [vmem:[#allocation2 + $0x20] sm:$0xff]
          %v567 = vld [vmem:[#allocation2 + $0x28] sm:$0xff]
          %v568 = vld [vmem:[#allocation2 + $0x30] sm:$0xff]
          %v569 = vld [vmem:[#allocation2 + $0x38] sm:$0xff]
          %v570 = vld [vmem:[#allocation2 + $0x40] sm:$0xff]
          %v571 = vld [vmem:[#allocation2 + $0x48] sm:$0xff]
          %v572 = vld [vmem:[#allocation2 + $0x50] sm:$0xff]
          %v573 = vld [vmem:[#allocation2 + $0x58] sm:$0xff]
          %v574 = vld [vmem:[#allocation2 + $0x60] sm:$0xff]
          %v575 = vld [vmem:[#allocation2 + $0x68] sm:$0xff]
          %v576 = vld [vmem:[#allocation2 + $0x70] sm:$0xff]
          %v577 = vld [vmem:[#allocation2 + $0x78] sm:$0xff]
          %v578 = vld [vmem:[%s2] sm:$0x1]
          %v580 = vperm.slane %v578, 0
          %v582 = vadd.f32 %v562, %v580
          %v583 = vadd.f32 %v563, %v580
          %v584 = vadd.f32 %v564, %v580
          %v585 = vadd.f32 %v565, %v580
          %v586 = vadd.f32 %v566, %v580
          %v587 = vadd.f32 %v567, %v580
          %v588 = vadd.f32 %v568, %v580
          %v589 = vadd.f32 %v569, %v580
          %v590 = vadd.f32 %v570, %v580
          %v591 = vadd.f32 %v571, %v580
          %v592 = vadd.f32 %v572, %v580
          %v593 = vadd.f32 %v573, %v580
          %v594 = vadd.f32 %v574, %v580
          %v595 = vadd.f32 %v575, %v580
          %v596 = vadd.f32 %v576, %v580
          %v597 = vadd.f32 %v577, %v580
          %v598 = vmax.f32 %v582, 0.0
          %v599 = vmax.f32 %v583, 0.0
          %v600 = vmax.f32 %v584, 0.0
          %v601 = vmax.f32 %v585, 0.0
          %v602 = vmax.f32 %v586, 0.0
          %v603 = vmax.f32 %v587, 0.0
          %v604 = vmax.f32 %v588, 0.0
          %v605 = vmax.f32 %v589, 0.0
          %v606 = vmax.f32 %v590, 0.0
          %v607 = vmax.f32 %v591, 0.0
          %v608 = vmax.f32 %v592, 0.0
          %v609 = vmax.f32 %v593, 0.0
          %v610 = vmax.f32 %v594, 0.0
          %v611 = vmax.f32 %v595, 0.0
          %v612 = vmax.f32 %v596, 0.0
          %v613 = vmax.f32 %v597, 0.0
          %v614 = vmul.f32 %v598, %v598
          %v615 = vmul.f32 %v599, %v599
          %v616 = vmul.f32 %v600, %v600
          %v617 = vmul.f32 %v601, %v601
          %v618 = vmul.f32 %v602, %v602
          %v619 = vmul.f32 %v603, %v603
          %v620 = vmul.f32 %v604, %v604
          %v621 = vmul.f32 %v605, %v605
          %v622 = vmul.f32 %v606, %v606
          %v623 = vmul.f32 %v607, %v607
          %v624 = vmul.f32 %v608, %v608
          %v625 = vmul.f32 %v609, %v609
          %v626 = vmul.f32 %v610, %v610
          %v627 = vmul.f32 %v611, %v611
          %v628 = vmul.f32 %v612, %v612
          %v629 = vmul.f32 %v613, %v613
          %630 = vadd.xlane.f32.xlu0 %v614
          %v631 = vpop.xlane.xlu0 %630
          %632 = vadd.xlane.f32.xlu0 %v615
          %v633 = vpop.xlane.xlu0 %632
          %634 = vadd.xlane.f32.xlu0 %v616
          %v635 = vpop.xlane.xlu0 %634
          %636 = vadd.xlane.f32.xlu0 %v617
          %v637 = vpop.xlane.xlu0 %636
          %638 = vadd.xlane.f32.xlu0 %v618
          %v639 = vpop.xlane.xlu0 %638
          %640 = vadd.xlane.f32.xlu0 %v619
          %v641 = vpop.xlane.xlu0 %640
          %642 = vadd.xlane.f32.xlu0 %v620
          %v643 = vpop.xlane.xlu0 %642
          %644 = vadd.xlane.f32.xlu0 %v621
          %v645 = vpop.xlane.xlu0 %644
          %646 = vadd.xlane.f32.xlu0 %v622
          %v647 = vpop.xlane.xlu0 %646
          %648 = vadd.xlane.f32.xlu0 %v623
          %v649 = vpop.xlane.xlu0 %648
          %650 = vadd.xlane.f32.xlu0 %v624
          %v651 = vpop.xlane.xlu0 %650
          %652 = vadd.xlane.f32.xlu0 %v625
          %v653 = vpop.xlane.xlu0 %652
          %654 = vadd.xlane.f32.xlu0 %v626
          %v655 = vpop.xlane.xlu0 %654
          %656 = vadd.xlane.f32.xlu0 %v627
          %v657 = vpop.xlane.xlu0 %656
          %658 = vadd.xlane.f32.xlu0 %v628
          %v659 = vpop.xlane.xlu0 %658
          %660 = vadd.xlane.f32.xlu0 %v629
          %v661 = vpop.xlane.xlu0 %660
          %v662 = vmax.f32 %v631, 1e-24
          %v663 = vmax.f32 %v633, 1e-24
          %v664 = vmax.f32 %v635, 1e-24
          %v665 = vmax.f32 %v637, 1e-24
          %v666 = vmax.f32 %v639, 1e-24
          %v667 = vmax.f32 %v641, 1e-24
          %v668 = vmax.f32 %v643, 1e-24
          %v669 = vmax.f32 %v645, 1e-24
          %v670 = vmax.f32 %v647, 1e-24
          %v671 = vmax.f32 %v649, 1e-24
          %v672 = vmax.f32 %v651, 1e-24
          %v673 = vmax.f32 %v653, 1e-24
          %v674 = vmax.f32 %v655, 1e-24
          %v675 = vmax.f32 %v657, 1e-24
          %v676 = vmax.f32 %v659, 1e-24
          %v677 = vmax.f32 %v661, 1e-24
          %v678 = vrsqrt.pop %v662
          %v679 = vmul.f32 %v678, %v662
          %v680 = vmul.f32 %v679, %v678
          %v681 = vmul.f32 0.5, %v680
          %v682 = vsub.f32 1.5, %v681
          %v683 = vmul.f32 %v678, %v682
          %vm684 = vweird.f32 %v662
          %vm685 = vweird.f32 %v678
          %vm686 = vmor %vm684, %vm685
          %v687 = vsel %vm686, %v678, %v683
          %v688 = vrsqrt.pop %v663
          %v689 = vmul.f32 %v688, %v663
          %v690 = vmul.f32 %v689, %v688
          %v691 = vmul.f32 0.5, %v690
          %v692 = vsub.f32 1.5, %v691
          %v693 = vmul.f32 %v688, %v692
          %vm694 = vweird.f32 %v663
          %vm695 = vweird.f32 %v688
          %vm696 = vmor %vm694, %vm695
          %v697 = vsel %vm696, %v688, %v693
          %v698 = vrsqrt.pop %v664
          %v699 = vmul.f32 %v698, %v664
          %v700 = vmul.f32 %v699, %v698
          %v701 = vmul.f32 0.5, %v700
          %v702 = vsub.f32 1.5, %v701
          %v703 = vmul.f32 %v698, %v702
          %vm704 = vweird.f32 %v664
          %vm705 = vweird.f32 %v698
          %vm706 = vmor %vm704, %vm705
          %v707 = vsel %vm706, %v698, %v703
          %v708 = vrsqrt.pop %v665
          %v709 = vmul.f32 %v708, %v665
          %v710 = vmul.f32 %v709, %v708
          %v711 = vmul.f32 0.5, %v710
          %v712 = vsub.f32 1.5, %v711
          %v713 = vmul.f32 %v708, %v712
          %vm714 = vweird.f32 %v665
          %vm715 = vweird.f32 %v708
          %vm716 = vmor %vm714, %vm715
          %v717 = vsel %vm716, %v708, %v713
          %v718 = vrsqrt.pop %v666
          %v719 = vmul.f32 %v718, %v666
          %v720 = vmul.f32 %v719, %v718
          %v721 = vmul.f32 0.5, %v720
          %v722 = vsub.f32 1.5, %v721
          %v723 = vmul.f32 %v718, %v722
          %vm724 = vweird.f32 %v666
          %vm725 = vweird.f32 %v718
          %vm726 = vmor %vm724, %vm725
          %v727 = vsel %vm726, %v718, %v723
          %v728 = vrsqrt.pop %v667
          %v729 = vmul.f32 %v728, %v667
          %v730 = vmul.f32 %v729, %v728
          %v731 = vmul.f32 0.5, %v730
          %v732 = vsub.f32 1.5, %v731
          %v733 = vmul.f32 %v728, %v732
          %vm734 = vweird.f32 %v667
          %vm735 = vweird.f32 %v728
          %vm736 = vmor %vm734, %vm735
          %v737 = vsel %vm736, %v728, %v733
          %v738 = vrsqrt.pop %v668
          %v739 = vmul.f32 %v738, %v668
          %v740 = vmul.f32 %v739, %v738
          %v741 = vmul.f32 0.5, %v740
          %v742 = vsub.f32 1.5, %v741
          %v743 = vmul.f32 %v738, %v742
          %vm744 = vweird.f32 %v668
          %vm745 = vweird.f32 %v738
          %vm746 = vmor %vm744, %vm745
          %v747 = vsel %vm746, %v738, %v743
          %v748 = vrsqrt.pop %v669
          %v749 = vmul.f32 %v748, %v669
          %v750 = vmul.f32 %v749, %v748
          %v751 = vmul.f32 0.5, %v750
          %v752 = vsub.f32 1.5, %v751
          %v753 = vmul.f32 %v748, %v752
          %vm754 = vweird.f32 %v669
          %vm755 = vweird.f32 %v748
          %vm756 = vmor %vm754, %vm755
          %v757 = vsel %vm756, %v748, %v753
          %v758 = vrsqrt.pop %v670
          %v759 = vmul.f32 %v758, %v670
          %v760 = vmul.f32 %v759, %v758
          %v761 = vmul.f32 0.5, %v760
          %v762 = vsub.f32 1.5, %v761
          %v763 = vmul.f32 %v758, %v762
          %vm764 = vweird.f32 %v670
          %vm765 = vweird.f32 %v758
          %vm766 = vmor %vm764, %vm765
          %v767 = vsel %vm766, %v758, %v763
          %v768 = vrsqrt.pop %v671
          %v769 = vmul.f32 %v768, %v671
          %v770 = vmul.f32 %v769, %v768
          %v771 = vmul.f32 0.5, %v770
          %v772 = vsub.f32 1.5, %v771
          %v773 = vmul.f32 %v768, %v772
          %vm774 = vweird.f32 %v671
          %vm775 = vweird.f32 %v768
          %vm776 = vmor %vm774, %vm775
          %v777 = vsel %vm776, %v768, %v773
          %v778 = vrsqrt.pop %v672
          %v779 = vmul.f32 %v778, %v672
          %v780 = vmul.f32 %v779, %v778
          %v781 = vmul.f32 0.5, %v780
          %v782 = vsub.f32 1.5, %v781
          %v783 = vmul.f32 %v778, %v782
          %vm784 = vweird.f32 %v672
          %vm785 = vweird.f32 %v778
          %vm786 = vmor %vm784, %vm785
          %v787 = vsel %vm786, %v778, %v783
          %v788 = vrsqrt.pop %v673
          %v789 = vmul.f32 %v788, %v673
          %v790 = vmul.f32 %v789, %v788
          %v791 = vmul.f32 0.5, %v790
          %v792 = vsub.f32 1.5, %v791
          %v793 = vmul.f32 %v788, %v792
          %vm794 = vweird.f32 %v673
          %vm795 = vweird.f32 %v788
          %vm796 = vmor %vm794, %vm795
          %v797 = vsel %vm796, %v788, %v793
          %v798 = vrsqrt.pop %v674
          %v799 = vmul.f32 %v798, %v674
          %v800 = vmul.f32 %v799, %v798
          %v801 = vmul.f32 0.5, %v800
          %v802 = vsub.f32 1.5, %v801
          %v803 = vmul.f32 %v798, %v802
          %vm804 = vweird.f32 %v674
          %vm805 = vweird.f32 %v798
          %vm806 = vmor %vm804, %vm805
          %v807 = vsel %vm806, %v798, %v803
          %v808 = vrsqrt.pop %v675
          %v809 = vmul.f32 %v808, %v675
          %v810 = vmul.f32 %v809, %v808
          %v811 = vmul.f32 0.5, %v810
          %v812 = vsub.f32 1.5, %v811
          %v813 = vmul.f32 %v808, %v812
          %vm814 = vweird.f32 %v675
          %vm815 = vweird.f32 %v808
          %vm816 = vmor %vm814, %vm815
          %v817 = vsel %vm816, %v808, %v813
          %v818 = vrsqrt.pop %v676
          %v819 = vmul.f32 %v818, %v676
          %v820 = vmul.f32 %v819, %v818
          %v821 = vmul.f32 0.5, %v820
          %v822 = vsub.f32 1.5, %v821
          %v823 = vmul.f32 %v818, %v822
          %vm824 = vweird.f32 %v676
          %vm825 = vweird.f32 %v818
          %vm826 = vmor %vm824, %vm825
          %v827 = vsel %vm826, %v818, %v823
          %v828 = vrsqrt.pop %v677
          %v829 = vmul.f32 %v828, %v677
          %v830 = vmul.f32 %v829, %v828
          %v831 = vmul.f32 0.5, %v830
          %v832 = vsub.f32 1.5, %v831
          %v833 = vmul.f32 %v828, %v832
          %vm834 = vweird.f32 %v677
          %vm835 = vweird.f32 %v828
          %vm836 = vmor %vm834, %vm835
          %v837 = vsel %vm836, %v828, %v833
          %v838 = vmul.f32 %v598, %v687
          %v839 = vmul.f32 %v599, %v697
          %v840 = vmul.f32 %v600, %v707
          %v841 = vmul.f32 %v601, %v717
          %v842 = vmul.f32 %v602, %v727
          %v843 = vmul.f32 %v603, %v737
          %v844 = vmul.f32 %v604, %v747
          %v845 = vmul.f32 %v605, %v757
          %v846 = vmul.f32 %v606, %v767
          %v847 = vmul.f32 %v607, %v777
          %v848 = vmul.f32 %v608, %v787
          %v849 = vmul.f32 %v609, %v797
          %v850 = vmul.f32 %v610, %v807
          %v851 = vmul.f32 %v611, %v817
          %v852 = vmul.f32 %v612, %v827
          %v853 = vmul.f32 %v613, %v837
          %854 = vst [vmem:[%s304] sm:$0xff] %v838
          %855 = vst [vmem:[%s304 + $0x8] sm:$0xff] %v839
          %856 = vst [vmem:[%s304 + $0x10] sm:$0xff] %v840
          %857 = vst [vmem:[%s304 + $0x18] sm:$0xff] %v841
          %858 = vst [vmem:[%s304 + $0x20] sm:$0xff] %v842
          %859 = vst [vmem:[%s304 + $0x28] sm:$0xff] %v843
          %860 = vst [vmem:[%s304 + $0x30] sm:$0xff] %v844
          %861 = vst [vmem:[%s304 + $0x38] sm:$0xff] %v845
          %862 = vst [vmem:[%s304 + $0x40] sm:$0xff] %v846
          %863 = vst [vmem:[%s304 + $0x48] sm:$0xff] %v847
          %864 = vst [vmem:[%s304 + $0x50] sm:$0xff] %v848
          %865 = vst [vmem:[%s304 + $0x58] sm:$0xff] %v849
          %866 = vst [vmem:[%s304 + $0x60] sm:$0xff] %v850
          %867 = vst [vmem:[%s304 + $0x68] sm:$0xff] %v851
          %868 = vst [vmem:[%s304 + $0x70] sm:$0xff] %v852
          %869 = vst [vmem:[%s304 + $0x78] sm:$0xff] %v853
        $region81: #{general_layer_forward.1} parent=68 // pred_fallthru
          _
        %s870 = sand.u32 %s112, 1
        %s871 = scalar_lea.sflag [#allocation5], %s870
        %s872 = sand.u32 %s112, 1
        %s873 = smul.addr %s872, 128
        %s874 = scalar_lea.vmem [#allocation4], %s873
        // Predicated region
        $region82: #{general_layer_forward.1} parent=68 // pred_check
          %p875 = pneg %p122
        $region83: #{general_layer_forward.1} parent=68 // pred_check_branch
          %877 = sbr.rel (%p875) target = $region85
        $region84: #{general_layer_forward.1} parent=68 // pred_region
          %s878 = smul.u32 16, %s21
          %880 = vsyncadd %s871, 0
          %s881 = smul.addr %s878, 8
          %s882 = scalar_lea.hbm %s3, %s881
          %s883 = sshll.u32 %s874, 4
          %s884 = int_to_ptr.vmem [resolvable:$true] %s883
          %s885 = sshll.u32 %s882, 4
          %s886 = int_to_ptr.hbm [resolvable:$true] %s885
          %891 = dma.vmem_to_hbm [thread:$0]  %s884, 2048, %s886, %s871, 128, 128, 8
        $region85: #{general_layer_forward.1} parent=68 // pred_fallthru
          _
      $region69: #{general_layer_forward.1} parent=5 // pred_fallthru
        _
      %p892 = scmp.le.s32.totalorder 2, %s12
      // Predicated region
      $region86: #{general_layer_forward.1} parent=5 // pred_check
        %p893 = pneg %p892
      $region87: #{general_layer_forward.1} parent=5 // pred_check_branch
        %895 = sbr.rel (%p893) target = $region89
      $region88: #{general_layer_forward.1} parent=5 // pred_region
        %s896 = ssub.s32 %s12, 2
        // Predicated region
        $region90: #{general_layer_forward.1} parent=88 // pred_check
          %p897 = pneg %p128
        $region91: #{general_layer_forward.1} parent=88 // pred_check_branch
          %899 = sbr.rel (%p897) target = $region93
        $region92: #{general_layer_forward.1} parent=88 // pred_region
          %s900 = sand.u32 %s113, 1
          %s901 = scalar_lea.sflag [#allocation5], %s900
          %s902 = sand.u32 %s113, 1
          %s903 = smul.addr %s902, 128
          %s904 = scalar_lea.vmem [#allocation4], %s903
          %906 = dma.done %s901, 2048
        $region93: #{general_layer_forward.1} parent=88 // pred_fallthru
          _
      $region89: #{general_layer_forward.1} parent=5 // pred_fallthru
        _
    $region6: #{general_layer_forward.1} parent=1 // loop_footer
      %s16 = sadd.s32 1, %s12
    $region7: #{general_layer_forward.1} parent=1 // loop_footer_branch
      %11 = sbr.rel target = $region3
    $region8: #{general_layer_forward.1} parent=1 // loop_exit
      _
    %907 = vsyncpa [#allocation5], 1
    %s908 = scalar_lea.sflag [#allocation5], 1
    %909 = vsyncpa %s908, 1

</llo_original>
